<compile_context>
chip_gen: v7x
topology: tpu7x:2x2x1
jax: 0.10.0
libtpu: 0.0.40
codegen_flags: <defaults>
</compile_context>

<pallas_src>
import math
import numpy as np

import jax
import jax.numpy as jnp
from jax.experimental import pallas as pl
from jax.experimental.pallas import tpu as pltpu

BN_EPS = 1e-5
BN_SCALE = float(1.0 / math.sqrt(1.0 + BN_EPS))   # frozen BN multiplier


def _round_up(x, m):
    return ((x + m - 1) // m) * m


def _cdiv(a, b):
    return -(-a // b)


def outS(i):
    i = int(i)
    i = (i + 1) / 2
    i = int(np.ceil((i + 1) / 2.0))
    i = (i + 1) / 2
    return int(i)


# --------------------------------------------------------------------------------------
# Hardware detection (generation-aware tiling / VMEM budgets)
# --------------------------------------------------------------------------------------

_HW = None


def _get_hw():
    global _HW
    if _HW is not None:
        return _HW
    kind = ""
    try:
        kind = jax.devices()[0].device_kind.lower()
    except Exception:
        pass
    if "v7" in kind or "7x" in kind:
        cap, align, cores = 64 << 20, 256, 2      # 64 MiB VMEM / TC, 2x256 MXU, 2 TCs
    elif "v6" in kind:
        cap, align, cores = 128 << 20, 256, 1     # 128 MiB VMEM, 2x256 MXU
    elif "v5" in kind:
        cap, align, cores = 128 << 20, 128, 1     # 128 MiB VMEM, 4x128 MXU
    else:
        cap, align, cores = 64 << 20, 128, 1      # conservative default
    try:
        cap = int(pltpu.get_tpu_info().vmem_capacity_bytes)
    except Exception:
        pass
    _HW = {
        "align": align,
        "cores": cores,
        "vmem_limit": int(cap * 3 // 4),          # scoped-VMEM ceiling with headroom
        "tile_budget": int(cap * 11 // 20),       # ~55% of capacity for live tiles
    }
    return _HW


# --------------------------------------------------------------------------------------
# Pallas kernels: tiled matmul with fused epilogue (bf16 in, f32 acc, bf16/f32 out)
# --------------------------------------------------------------------------------------

def _make_mm_kernel(scale: float, relu: bool, has_res: bool, out_dtype):
    """out = [relu]( acc*scale + bias [+ residual] ), acc = sum_k A_k @ B_k (bf16 MXU)."""

    def finish(acc, bias, res):
        y = acc
        if scale != 1.0:
            y = y * scale
        y = y + bias
        if res is not None:
            y = y + res.astype(jnp.float32)
        if relu:
            y = jnp.maximum(y, 0.0)
        return y.astype(out_dtype)

    if has_res:
        def kernel(a_ref, b_ref, bias_ref, res_ref, o_ref, acc_ref):
            k = pl.program_id(2)

            @pl.when(k == 0)
            def _():
                acc_ref[...] = jnp.zeros_like(acc_ref)

            acc_ref[...] += jnp.dot(a_ref[...], b_ref[...],
                                    preferred_element_type=jnp.float32)

            @pl.when(k == pl.num_programs(2) - 1)
            def _():
                o_ref[...] = finish(acc_ref[...], bias_ref[...], res_ref[...])

        return kernel

    def kernel(a_ref, b_ref, bias_ref, o_ref, acc_ref):
        k = pl.program_id(2)

        @pl.when(k == 0)
        def _():
            acc_ref[...] = jnp.zeros_like(acc_ref)

        acc_ref[...] += jnp.dot(a_ref[...], b_ref[...],
                                preferred_element_type=jnp.float32)

        @pl.when(k == pl.num_programs(2) - 1)
        def _():
            o_ref[...] = finish(acc_ref[...], bias_ref[...], None)

    return kernel


_MM_CACHE = {}


def _get_matmul(mp, kp, np_, tm, tk, tn, scale, relu, has_res, out_dtype, vmem_limit):
    key = (mp, kp, np_, tm, tk, tn, scale, relu, has_res, np.dtype(out_dtype).name)
    fn = _MM_CACHE.get(key)
    if fn is not None:
        return fn

    kernel = _make_mm_kernel(scale, relu, has_res, out_dtype)
    in_specs = [
        pl.BlockSpec((tm, tk), lambda i, j, k: (i, k)),    # A activation/patches (bf16)
        pl.BlockSpec((tk, tn), lambda i, j, k: (k, j)),    # B weights (bf16)
        pl.BlockSpec((1, tn), lambda i, j, k: (0, j)),     # bias (f32)
    ]
    if has_res:
        in_specs.append(pl.BlockSpec((tm, tn), lambda i, j, k: (i, j)))  # residual bf16
    # TODO(synk): if a profile shows exposed DMA on the K-streamed A/B tiles, add
    #             pipeline_mode=pl.Buffered(3) to the A/B specs above.

    fn = jax.jit(pl.pallas_call(
        kernel,
        out_shape=jax.ShapeDtypeStruct((mp, np_), out_dtype),
        grid_spec=pltpu.PrefetchScalarGridSpec(
            num_scalar_prefetch=0,
            grid=(mp // tm, np_ // tn, kp // tk),
            in_specs=in_specs,
            out_specs=pl.BlockSpec((tm, tn), lambda i, j, k: (i, j)),
            scratch_shapes=[pltpu.VMEM((tm, tn), jnp.float32)],
        ),
        compiler_params=pltpu.CompilerParams(
            dimension_semantics=("parallel", "parallel", "arbitrary"),
            vmem_limit_bytes=int(vmem_limit)),
    ))
    _MM_CACHE[key] = fn
    return fn


# --------------------------------------------------------------------------------------
# Tile selection (explicit per-step VMEM accounting, MXU-aligned M tiles)
# --------------------------------------------------------------------------------------

def _pick_div_tile(total, candidates):
    for c in candidates:
        if total % c == 0:
            return min(c, total)
    return total


def _max_tm_for_budget(budget, tk, tn, out_b, has_res):
    fixed = 2 * tk * tn * 2 + 2 * tn * 4                 # B double-buf + bias
    per = 2 * tk * 2 + 2 * tn * out_b + tn * 4           # A dbl + out dbl + acc
    if has_res:
        per += 2 * tn * 2                                # residual (bf16) dbl
    return max((budget - fixed) // per, 16)


def _pick_m(m, tk, tn, out_b, has_res, hw):
    align = hw["align"]
    m16 = _round_up(max(m, 16), 16)
    cap = int(max(min(_max_tm_for_budget(hw["tile_budget"], tk, tn, out_b, has_res),
                      1024), 128))
    if m16 <= cap:
        # Single M tile == full padded M; no extra zero-row HBM traffic from alignment.
        return m16, m16
    tm_align = align if cap >= align else 128
    base = max((cap // tm_align) * tm_align, tm_align)
    nmt = _cdiv(m16, base)
    tm = _round_up(_cdiv(m16, nmt), tm_align)            # MXU-aligned tile (256 / 128)
    mp = _round_up(m16, tm)
    return mp, tm


# --------------------------------------------------------------------------------------
# Fused matmul wrapper (shared by all convs and the fused classifier)
# --------------------------------------------------------------------------------------

def _matmul_fused(a, b, bias, *, scale=1.0, relu=False, residual=None,
                  out_dtype=jnp.bfloat16):
    m, kdim = a.shape
    cout = b.shape[1]
    hw = _get_hw()

    kp = _round_up(kdim, 128)
    np_ = _round_up(cout, 128)
    tk = _pick_div_tile(kp, (512, 384, 256, 128))
    tn = np_ if np_ <= 2048 else _pick_div_tile(np_, (2048, 1024, 512, 256, 128))
    out_b = np.dtype(out_dtype).itemsize
    has_res = residual is not None
    mp, tm = _pick_m(m, tk, tn, out_b, has_res, hw)

    # v7x: keep >= 2 (i, j) tiles so both TensorCores get work.
    if hw["cores"] >= 2 and (mp // tm) * (np_ // tn) < 2:
        m16 = _round_up(max(m, 16), 16)
        if m16 >= 2 * hw["align"]:
            tm = _round_up(_cdiv(m16, 2), hw["align"])
            mp = _round_up(m16, tm)

    if (mp, kp) != (m, kdim):
        a = jnp.pad(a, ((0, mp - m), (0, kp - kdim)))
    if (kp, np_) != (kdim, cout):
        b = jnp.pad(b, ((0, kp - kdim), (0, np_ - cout)))

    if bias is None:
        bias_p = jnp.zeros((1, np_), jnp.float32)
    else:
        bias_p = jnp.pad(bias.astype(jnp.float32).reshape(1, cout),
                         ((0, 0), (0, np_ - cout)))

    args = [a, b, bias_p]
    if has_res:
        res = residual.astype(jnp.bfloat16)
        if (mp, np_) != (m, cout):
            res = jnp.pad(res, ((0, mp - m), (0, np_ - cout)))
        args.append(res)

    fn = _get_matmul(mp, kp, np_, tm, tk, tn, float(scale), bool(relu),
                     has_res, out_dtype, hw["vmem_limit"])
    return fn(*args)[:m, :cout]


def conv2d_nhwc(x, w_hwio, bias=None, stride=1, padding=0, dilation=1,
                bn_scale=1.0, relu=False, residual=None, out_dtype=jnp.bfloat16):
    n, h, w, cin = x.shape
    kh, kw, _, cout = w_hwio.shape
    oh = (h + 2 * padding - dilation * (kh - 1) - 1) // stride + 1
    ow = (w + 2 * padding - dilation * (kw - 1) - 1) // stride + 1

    xb = x.astype(jnp.bfloat16)                 # no-op when already bf16
    if kh == 1 and kw == 1 and padding == 0:
        # 1x1 conv: no im2col -- a strided spatial slice feeds the matmul directly.
        a = xb[:, ::stride, ::stride, :][:, :oh, :ow, :].reshape(n * oh * ow, cin)
    else:
        # TODO(synk): kxk convs still materialize an im2col patch matrix in HBM (bf16);
        #             a fully in-kernel tap gather (taps on the K grid axis) is future work.
        xp = jnp.pad(xb, ((0, 0), (padding, padding), (padding, padding), (0, 0)))
        cols = []
        for i in range(kh):
            for j in range(kw):
                hs, ws_ = i * dilation, j * dilation
                cols.append(xp[:, hs:hs + (oh - 1) * stride + 1:stride,
                                ws_:ws_ + (ow - 1) * stride + 1:stride, :])
        a = jnp.stack(cols, axis=3).reshape(n * oh * ow, kh * kw * cin)
    b = w_hwio.astype(jnp.bfloat16).reshape(kh * kw * cin, cout)

    res = None
    if residual is not None:
        res = residual.reshape(n * oh * ow, cout)

    out = _matmul_fused(a, b, bias, scale=bn_scale, relu=relu,
                        residual=res, out_dtype=out_dtype)
    return out.reshape(n, oh, ow, cout)


def classifier_fused(x, weights, biases, dilations):
    """Classifier_Module: sum of 4 dilated 3x3 convs fused into ONE K-reduction.

    All branches share the input and have stride 1 / padding == dilation, so their
    patch matrices concatenate along K and their biases simply add.
    """
    n, h, w, cin = x.shape
    nl = weights[0].shape[-1]
    pmax = max(dilations)
    xp = jnp.pad(x.astype(jnp.bfloat16),
                 ((0, 0), (pmax, pmax), (pmax, pmax), (0, 0)))
    cols = []
    for d in dilations:
        for i in range(3):
            for j in range(3):
                hs = pmax + (i - 1) * d
                vs = pmax + (j - 1) * d
                cols.append(xp[:, hs:hs + h, vs:vs + w, :])
    a = jnp.stack(cols, axis=3).reshape(n * h * w, len(cols) * cin)
    b = jnp.concatenate(
        [wt.astype(jnp.bfloat16).reshape(9 * cin, nl) for wt in weights], axis=0)
    bias = biases[0]
    for bb in biases[1:]:
        bias = bias + bb
    out = _matmul_fused(a, b, bias, scale=1.0, relu=False,
                        residual=None, out_dtype=jnp.float32)   # final logits in f32
    return out.reshape(n, h, w, nl)


# --------------------------------------------------------------------------------------
# Pallas kernels: lane-dense channel softmax / max3 + softmax
#   Layout (C, M): spatial on the 128-lane axis, channels on sublanes.
# --------------------------------------------------------------------------------------

def _softmax_cm_kernel(x_ref, o_ref):
    x = x_ref[...]
    mx = jnp.max(x, axis=0, keepdims=True)
    e = jnp.exp(x - mx)
    s = jnp.sum(e, axis=0, keepdims=True)
    o_ref[...] = e * pl.reciprocal(s, approx=True)


def _max3_softmax_cm_kernel(a_ref, b_ref, c_ref, m_ref, s_ref):
    m = jnp.maximum(jnp.maximum(a_ref[...], b_ref[...]), c_ref[...])
    m_ref[...] = m
    mx = jnp.max(m, axis=0, keepdims=True)
    e = jnp.exp(m - mx)
    s = jnp.sum(e, axis=0, keepdims=True)
    s_ref[...] = e * pl.reciprocal(s, approx=True)


_SM_CACHE = {}


def _get_softmax(c, mp, tcol):
    key = ("sm", c, mp, tcol)
    fn = _SM_CACHE.get(key)
    if fn is None:
        spec = pl.BlockSpec((c, tcol), lambda j: (0, j))
        fn = jax.jit(pl.pallas_call(
            _softmax_cm_kernel,
            out_shape=jax.ShapeDtypeStruct((c, mp), jnp.float32),
            grid_spec=pltpu.PrefetchScalarGridSpec(
                num_scalar_prefetch=0,
                grid=(mp // tcol,),
                in_specs=[spec],
                out_specs=pl.BlockSpec((c, tcol), lambda j: (0, j)),
            ),
            compiler_params=pltpu.CompilerParams(
                dimension_semantics=("parallel",)),
        ))
        _SM_CACHE[key] = fn
    return fn


def _get_max3_softmax(c, mp, tcol):
    key = ("m3", c, mp, tcol)
    fn = _SM_CACHE.get(key)
    if fn is None:
        spec = pl.BlockSpec((c, tcol), lambda j: (0, j))
        fn = jax.jit(pl.pallas_call(
            _max3_softmax_cm_kernel,
            out_shape=(jax.ShapeDtypeStruct((c, mp), jnp.float32),
                       jax.ShapeDtypeStruct((c, mp), jnp.float32)),
            grid_spec=pltpu.PrefetchScalarGridSpec(
                num_scalar_prefetch=0,
                grid=(mp // tcol,),
                in_specs=[spec, spec, spec],
                out_specs=[pl.BlockSpec((c, tcol), lambda j: (0, j)),
                           pl.BlockSpec((c, tcol), lambda j: (0, j))],
            ),
            compiler_params=pltpu.CompilerParams(
                dimension_semantics=("parallel",)),
        ))
        _SM_CACHE[key] = fn
    return fn


def _nhwc_to_cm(x, tcol_cap=2048):
    n, h, w, c = x.shape
    m = n * h * w
    tcol = min(tcol_cap, _round_up(m, 128))
    mp = _round_up(m, tcol)
    xt = jnp.transpose(x.reshape(m, c).astype(jnp.float32))      # (c, m)
    if mp != m:
        xt = jnp.pad(xt, ((0, 0), (0, mp - m)))
    return xt, m, mp, tcol


def _cm_to_nchw(xt, n, h, w, c, m):
    return jnp.transpose(xt[:, :m].reshape(c, n, h, w), (1, 0, 2, 3))


def softmax_channels_to_nchw(x_nhwc):
    n, h, w, c = x_nhwc.shape
    xt, m, mp, tcol = _nhwc_to_cm(x_nhwc)
    out = _get_softmax(c, mp, tcol)(xt)
    return _cm_to_nchw(out, n, h, w, c, m)


def max3_softmax_to_nchw(a, b, c_in):
    n, h, w, c = a.shape
    at, m, mp, tcol = _nhwc_to_cm(a)
    bt, _, _, _ = _nhwc_to_cm(b)
    ct, _, _, _ = _nhwc_to_cm(c_in)
    mt, st = _get_max3_softmax(c, mp, tcol)(at, bt, ct)
    return _cm_to_nchw(mt, n, h, w, c, m), _cm_to_nchw(st, n, h, w, c, m)


# --------------------------------------------------------------------------------------
# Small plain-JAX glue: ceil-mode maxpool and bilinear resize
# --------------------------------------------------------------------------------------

def maxpool_3x3_s2p1_ceil(x):
    # TODO(synk): maxpool window-max kept in plain JAX glue (negligible vs. conv hot path).
    n, h, w, c = x.shape
    k, s, p = 3, 2, 1

    def osize(d):
        o = int(math.ceil((d + 2 * p - k) / s)) + 1
        if (o - 1) * s >= d + p:   # last window must start inside the (unpadded) input
            o -= 1
        return o

    oh, ow = osize(h), osize(w)
    ph = (oh - 1) * s + k - h - p
    pw = (ow - 1) * s + k - w - p
    assert ph >= 0 and pw >= 0
    xp = jnp.pad(x, ((0, 0), (p, ph), (p, pw), (0, 0)), constant_values=-np.inf)
    vals = []
    for i in range(k):
        for j in range(k):
            vals.append(xp[:, i:i + (oh - 1) * s + 1:s,
                            j:j + (ow - 1) * s + 1:s, :])
    return jnp.max(jnp.stack(vals, axis=0), axis=0)


def _resize_indices(in_size, out_size):
    scale = in_size / out_size
    j = jnp.arange(out_size, dtype=jnp.float32)
    src = jnp.maximum(scale * (j + 0.5) - 0.5, 0.0)
    i0 = jnp.minimum(jnp.floor(src).astype(jnp.int32), in_size - 1)
    i1 = jnp.minimum(i0 + 1, in_size - 1)
    w1 = src - i0.astype(jnp.float32)
    return i0, i1, w1


def bilinear_resize_nhwc(x, out_h, out_w):
    i0, i1, wh = _resize_indices(x.shape[1], out_h)
    r = (x[:, i0, :, :] * (1.0 - wh)[None, :, None, None]
         + x[:, i1, :, :] * wh[None, :, None, None])
    j0, j1, ww = _resize_indices(x.shape[2], out_w)
    return (r[:, :, j0, :] * (1.0 - ww)[None, None, :, None]
            + r[:, :, j1, :] * ww[None, None, :, None])


# --------------------------------------------------------------------------------------
# Model: ResNet-101 + ASPP-style classifier (Bottleneck block, expansion = 4)
# --------------------------------------------------------------------------------------

CLS_DILATIONS = (6, 12, 18, 24)


def make_params(key, no_labels):
    counter = [0]

    def nk():
        counter[0] += 1
        return jax.random.fold_in(key, counter[0])

    def wnorm(shape):
        return 0.01 * jax.random.normal(nk(), shape, jnp.float32)

    params = {'conv1': wnorm((7, 7, 3, 64))}
    inplanes = 64

    def make_layer(planes, blocks, stride, dilation):
        nonlocal inplanes
        layer = []
        for bi in range(blocks):
            s = stride if bi == 0 else 1
            cin = inplanes
            blk = {
                'conv1': wnorm((1, 1, cin, planes)),
                'conv2': wnorm((3, 3, planes, planes)),
                'conv3': wnorm((1, 1, planes, planes * 4)),
                'stride': s,
                'dilation': dilation,
            }
            if bi == 0:   # downsample (stride != 1 / channel change / dilation 2,4)
                blk['ds'] = wnorm((1, 1, cin, planes * 4))
            layer.append(blk)
            inplanes = planes * 4
        return layer

    params['layer1'] = make_layer(64, 3, 1, 1)
    params['layer2'] = make_layer(128, 4, 2, 1)
    params['layer3'] = make_layer(256, 23, 1, 2)
    params['layer4'] = make_layer(512, 3, 1, 4)
    params['cls_w'] = [wnorm((3, 3, 2048, no_labels)) for _ in range(4)]
    params['cls_b'] = [0.01 * jax.random.normal(nk(), (no_labels,), jnp.float32)
                       for _ in range(4)]
    return params


def bottleneck_forward(x, blk):
    stride, dilation = blk['stride'], blk['dilation']
    pad = {1: 1, 2: 2, 4: 4}[dilation]
    out = conv2d_nhwc(x, blk['conv1'], stride=stride,
                      bn_scale=BN_SCALE, relu=True)
    out = conv2d_nhwc(out, blk['conv2'], padding=pad, dilation=dilation,
                      bn_scale=BN_SCALE, relu=True)
    if 'ds' in blk:
        residual = conv2d_nhwc(x, blk['ds'], stride=stride,
                               bn_scale=BN_SCALE, relu=False)
    else:
        residual = x
    # bn3(conv3) + residual, then ReLU -- fused in the matmul epilogue (bf16 residual).
    return conv2d_nhwc(out, blk['conv3'], bn_scale=BN_SCALE, relu=True,
                       residual=residual)


def resnet_scale_forward(x_nhwc, params):
    x = conv2d_nhwc(x_nhwc, params['conv1'], stride=2, padding=3,
                    bn_scale=BN_SCALE, relu=True)
    x = maxpool_3x3_s2p1_ceil(x)
    for name in ('layer1', 'layer2', 'layer3', 'layer4'):
        for blk in params[name]:
            x = bottleneck_forward(x, blk)
    # Classifier_Module: sum of 4 dilated 3x3 convs fused into one Pallas matmul call.
    return classifier_fused(x, params['cls_w'], params['cls_b'], CLS_DILATIONS)


def ms_deeplab_forward(x_nchw, params):
    """Returns (out, out1) as in the PyTorch module; every tensor is NCHW."""
    input_size = x_nchw.shape[2]
    s75 = int(input_size * 0.75) + 1
    s50 = int(input_size * 0.5) + 1
    s_out = outS(input_size)

    x = jnp.transpose(x_nchw, (0, 2, 3, 1)).astype(jnp.float32)   # NCHW -> NHWC
    x2 = bilinear_resize_nhwc(x, s75, s75)
    x3 = bilinear_resize_nhwc(x, s50, s50)

    a1 = resnet_scale_forward(x, params)     # Scale(x)      (NHWC, f32 logits)
    y = resnet_scale_forward(x2, params)     # Scale(x2)
    a3 = resnet_scale_forward(x3, params)    # Scale(x3)

    a0 = softmax_channels_to_nchw(a1)
    z1 = softmax_channels_to_nchw(y)
    a4 = softmax_channels_to_nchw(a3)

    a2 = bilinear_resize_nhwc(y, s_out, s_out)        # interp3(Scale(x2))
    x3o = bilinear_resize_nhwc(a3, s_out, s_out)      # interp3(Scale(x3))
    fused_max_nchw, a5 = max3_softmax_to_nchw(a1, a2, x3o)

    to_nchw = lambda t: jnp.transpose(t, (0, 3, 1, 2))
    out = [a0, z1, a4, a5]
    out1 = [to_nchw(a1), to_nchw(y), to_nchw(a3), fused_max_nchw]
    return out, out1


# --------------------------------------------------------------------------------------

if __name__ == "__main__":
    key = jax.random.PRNGKey(0)
    NoLabels = 8
    params = make_params(jax.random.fold_in(key, 1), NoLabels)
    x = jax.random.normal(jax.random.fold_in(key, 2), (2, 3, 16, 16), jnp.float32)

    out, out1 = ms_deeplab_forward(x, params)
    jax.block_until_ready(out)
    jax.block_until_ready(out1)

    s_final = outS(16)           # = 3
    assert out[0].shape == (2, NoLabels, s_final, s_final)
    assert out[1].shape == (2, NoLabels, 2, 2)
    assert out[2].shape == (2, NoLabels, 2, 2)
    assert out[3].shape == (2, NoLabels, s_final, s_final)
    assert out1[3].shape == (2, NoLabels, s_final, s_final)
    assert all(bool(jnp.all(jnp.isfinite(t))) for t in out + out1)

    print("KERNEL_OK")
</pallas_src>

<mosaic_0001>
module attributes {stable_mosaic.version = 11 : i64} {
  func.func @kernel(%arg0: i32, %arg1: i32, %arg2: i32, %arg3: memref<128x256xbf16, #tpu.memory_space<vmem>>, %arg4: memref<256x128xbf16, #tpu.memory_space<vmem>>, %arg5: memref<1x128xf32, #tpu.memory_space<vmem>>, %arg6: memref<128x128xbf16, #tpu.memory_space<vmem>>, %arg7: memref<128x128xf32, #tpu.memory_space<vmem>>) attributes {dimension_semantics = [#tpu.dimension_semantics<parallel>, #tpu.dimension_semantics<parallel>, #tpu.dimension_semantics<arbitrary>], iteration_bounds = array<i64: 1, 1, 1>, scalar_prefetch = 0 : i64, scratch_operands = 1 : i64, tpu.core_type = #tpu.core_type<tc>, window_params = [{transform_indices = @transform_0, window_bounds = array<i64: 128, 256>}, {transform_indices = @transform_1, window_bounds = array<i64: 256, 128>}, {transform_indices = @transform_2, window_bounds = array<i64: 1, 128>}, {transform_indices = @transform_3, window_bounds = array<i64: 128, 128>}]} {
    %c0_i32 = arith.constant 0 : i32
    %0 = arith.cmpi eq, %arg2, %c0_i32 : i32
    %1 = arith.extui %0 : i1 to i32
    %c0_i32_0 = arith.constant 0 : i32
    %2 = arith.cmpi ne, %1, %c0_i32_0 : i32
    scf.if %2 {
      %cst_10 = arith.constant 0.000000e+00 : f32
      %12 = vector.broadcast %cst_10 : f32 to vector<128x128xf32>
      %c0_11 = arith.constant 0 : index
      %c0_12 = arith.constant 0 : index
      %13 = vector.load %arg7[%c0_11, %c0_12] : memref<128x128xf32, #tpu.memory_space<vmem>>, vector<128x128xf32>
      tpu.vector_store %arg7[%c0_11, %c0_12], %12 {strides = array<i32>} : memref<128x128xf32, #tpu.memory_space<vmem>>, vector<128x128xf32>,
    } else {
    }
    %c0 = arith.constant 0 : index
    %c0_1 = arith.constant 0 : index
    %3 = vector.load %arg7[%c0, %c0_1] : memref<128x128xf32, #tpu.memory_space<vmem>>, vector<128x128xf32>
    %c0_2 = arith.constant 0 : index
    %c0_3 = arith.constant 0 : index
    %4 = vector.load %arg3[%c0_2, %c0_3] : memref<128x256xbf16, #tpu.memory_space<vmem>>, vector<128x256xbf16>
    %c0_4 = arith.constant 0 : index
    %c0_5 = arith.constant 0 : index
    %5 = vector.load %arg4[%c0_4, %c0_5] : memref<256x128xbf16, #tpu.memory_space<vmem>>, vector<256x128xbf16>
    %cst = arith.constant dense<0.000000e+00> : vector<128x128xf32>
    %6 = tpu.matmul %4, %5, %cst {dimension_numbers = #tpu.dot_dimension_numbers<[1], [0], [0], [1], [0, 0, 1, 1], [], []>} : vector<128x256xbf16>, vector<256x128xbf16>, vector<128x128xf32> -> vector<128x128xf32>
    %7 = arith.addf %3, %6 : vector<128x128xf32>
    %c0_6 = arith.constant 0 : index
    %c0_7 = arith.constant 0 : index
    %8 = vector.load %arg7[%c0_6, %c0_7] : memref<128x128xf32, #tpu.memory_space<vmem>>, vector<128x128xf32>
    tpu.vector_store %arg7[%c0_6, %c0_7], %7 {strides = array<i32>} : memref<128x128xf32, #tpu.memory_space<vmem>>, vector<128x128xf32>,
    %c0_i32_8 = arith.constant 0 : i32
    %9 = arith.cmpi eq, %arg2, %c0_i32_8 : i32
    %10 = arith.extui %9 : i1 to i32
    %c0_i32_9 = arith.constant 0 : i32
    %11 = arith.cmpi ne, %10, %c0_i32_9 : i32
    scf.if %11 {
      %c0_10 = arith.constant 0 : index
      %c0_11 = arith.constant 0 : index
      %12 = vector.load %arg7[%c0_10, %c0_11] : memref<128x128xf32, #tpu.memory_space<vmem>>, vector<128x128xf32>
      %c0_12 = arith.constant 0 : index
      %c0_13 = arith.constant 0 : index
      %13 = vector.load %arg5[%c0_12, %c0_13] : memref<1x128xf32, #tpu.memory_space<vmem>>, vector<1x128xf32>
      %cst_14 = arith.constant 0.999994993 : f32
      %14 = vector.broadcast %cst_14 : f32 to vector<128x128xf32>
      %15 = arith.mulf %12, %14 : vector<128x128xf32>
      %16 = vector.broadcast %13 : vector<1x128xf32> to vector<128x128xf32>
      %17 = arith.addf %15, %16 : vector<128x128xf32>
      %cst_15 = arith.constant 0.000000e+00 : f32
      %18 = vector.broadcast %cst_15 : f32 to vector<128x128xf32>
      %19 = arith.maximumf %17, %18 : vector<128x128xf32>
      %20 = arith.truncf %19 : vector<128x128xf32> to vector<128x128xbf16>
      %c0_16 = arith.constant 0 : index
      %c0_17 = arith.constant 0 : index
      %21 = vector.load %arg6[%c0_16, %c0_17] : memref<128x128xbf16, #tpu.memory_space<vmem>>, vector<128x128xbf16>
      tpu.vector_store %arg6[%c0_16, %c0_17], %20 {strides = array<i32>} : memref<128x128xbf16, #tpu.memory_space<vmem>>, vector<128x128xbf16>,
    } else {
    }
    return
  }
  func.func @transform_0(%arg0: i32, %arg1: i32, %arg2: i32) -> (i32, i32) {
    %c0_i32 = arith.constant 0 : i32
    return %arg0, %arg2 : i32, i32
  }
  func.func @transform_1(%arg0: i32, %arg1: i32, %arg2: i32) -> (i32, i32) {
    %c0_i32 = arith.constant 0 : i32
    return %arg2, %arg1 : i32, i32
  }
  func.func @transform_2(%arg0: i32, %arg1: i32, %arg2: i32) -> (i32, i32) {
    %c0_i32 = arith.constant 0 : i32
    %c0_i32_0 = arith.constant 0 : i32
    return %c0_i32, %arg1 : i32, i32
  }
  func.func @transform_3(%arg0: i32, %arg1: i32, %arg2: i32) -> (i32, i32) {
    %c0_i32 = arith.constant 0 : i32
    return %arg0, %arg1 : i32, i32
  }
}

</mosaic_0001>

<llo_original>
// kernel: tpu_custom_call.1
$region0: #{tpu_custom_call.1}
  #allocation0 [shape = 'u32[]', space=smem, size = 0x4, offset = 0x4, fixed_abs, tag = 'smem constant byte address 0x4 - core index']
  #allocation1 [shape = 'u32[144,128]{1,0:T(1,128)}', space=vmem, size = 0x12000, scoped, tag = 'internal scratch']
  #allocation2 [shape = 'f32[128,128]{1,0:T(8,128)}', space=vmem, size = 0x10000, scoped, tag = 'scratch operand']
  %s0 = inlined_call_operand.hbm [shape: bf16[128,256], index: 0, kind: input, shape index: {}]
  %s1 = inlined_call_operand.hbm [shape: bf16[256,128], index: 1, kind: input, shape index: {}]
  %s2 = inlined_call_operand.vmem [shape: f32[1,128], index: 2, kind: input, shape index: {}]
  %s3 = inlined_call_operand.hbm [shape: bf16[128,128], index: 3, kind: output, shape index: {}]
  %s4 = sld [smem:[#allocation0]]
  $region38: #{tpu_custom_call.1} parent=0
    _
  %s6 = ssub.s32 1, %s4
  %s7 = scalar_select 0, %s6, %s4
  $region1: #{tpu_custom_call.1} parent=0
    #allocation3 [shape = 'u8[65536]{0}', space=vmem, size = 0x10000, scoped, tag = 'input window, operand 0, single buffered']
    #allocation4 [shape = 's32[1]{0}', space=sflag, size = 0x4, scoped, tag = 'scoped memory for tpu_custom_call.1']
    #allocation5 [shape = 's32[1]{0}', space=sflag, size = 0x4, scoped, tag = 'scoped memory for tpu_custom_call.1']
    #allocation6 [shape = 'u8[65536]{0}', space=vmem, size = 0x10000, scoped, tag = 'input window, operand 1, single buffered']
    #allocation7 [shape = 's32[1]{0}', space=sflag, size = 0x4, scoped, tag = 'scoped memory for tpu_custom_call.1']
    #allocation8 [shape = 'u8[32768]{0}', space=vmem, size = 0x8000, scoped, tag = 'output window, operand 0, single buffered']
    %8 = vsyncpa [#allocation4], 0
    %9 = vsyncpa [#allocation7], 0
    %10 = vsyncpa [#allocation5], 0
    // Predicated region
    $region2: #{tpu_custom_call.1} parent=1 // pred_check
      _
    $region3: #{tpu_custom_call.1} parent=1 // pred_check_branch
      %12 = sbr.rel (0) target = $region5
    $region4: #{tpu_custom_call.1} parent=1 // pred_region
      %s14 = ssub.s32 2048, 2048
      %15 = vsyncadd [#allocation4], %s14
      %s16 = sshll.u32 [#allocation3], 4
      %s17 = int_to_ptr.vmem [resolvable:$true] %s16
      %22 = dma.hbm_to_vmem [thread:$0]  %s0, 2048, %s17, [#allocation4], 128, 128, 8
    $region5: #{tpu_custom_call.1} parent=1 // pred_fallthru
      _
    // Predicated region
    $region6: #{tpu_custom_call.1} parent=1 // pred_check
      _
    $region7: #{tpu_custom_call.1} parent=1 // pred_check_branch
      %24 = sbr.rel (0) target = $region9
    $region8: #{tpu_custom_call.1} parent=1 // pred_region
      %s26 = ssub.s32 2048, 2048
      %27 = vsyncadd [#allocation7], %s26
      %s28 = sshll.u32 [#allocation6], 4
      %s29 = int_to_ptr.vmem [resolvable:$true] %s28
      %34 = dma.hbm_to_vmem [thread:$0]  %s1, 2048, %s29, [#allocation7], 64, 64, 4
    $region9: #{tpu_custom_call.1} parent=1 // pred_fallthru
      _
    // Predicated region
    $region10: #{tpu_custom_call.1} parent=1 // pred_check
      _
    $region11: #{tpu_custom_call.1} parent=1 // pred_check_branch
      %36 = sbr.rel (0) target = $region13
    $region12: #{tpu_custom_call.1} parent=1 // pred_region
      _
    $region13: #{tpu_custom_call.1} parent=1 // pred_fallthru
      _
    // Predicated region
    $region14: #{tpu_custom_call.1} parent=1 // pred_check
      _
    $region15: #{tpu_custom_call.1} parent=1 // pred_check_branch
      %38 = sbr.rel (0) target = $region17
    $region16: #{tpu_custom_call.1} parent=1 // pred_region
      %39 = dma.done [#allocation4], 2048
    $region17: #{tpu_custom_call.1} parent=1 // pred_fallthru
      _
    // Predicated region
    $region18: #{tpu_custom_call.1} parent=1 // pred_check
      _
    $region19: #{tpu_custom_call.1} parent=1 // pred_check_branch
      %41 = sbr.rel (0) target = $region21
    $region20: #{tpu_custom_call.1} parent=1 // pred_region
      %42 = dma.done [#allocation7], 2048
    $region21: #{tpu_custom_call.1} parent=1 // pred_fallthru
      _
    %p44 = scmp.eq.s32.totalorder 0, 0
    // Predicated region
    $region22: #{tpu_custom_call.1} parent=1 // pred_check
      %p45 = pneg %p44
    $region23: #{tpu_custom_call.1} parent=1 // pred_check_branch
      %47 = sbr.rel (%p45) target = $region25
    $region24: #{tpu_custom_call.1} parent=1 // pred_region
      %48 = vst [vmem:[#allocation2] sm:$0xff] 0.0
      %49 = vst [vmem:[#allocation2 + $0x8] sm:$0xff] 0.0
      %50 = vst [vmem:[#allocation2 + $0x10] sm:$0xff] 0.0
      %51 = vst [vmem:[#allocation2 + $0x18] sm:$0xff] 0.0
      %52 = vst [vmem:[#allocation2 + $0x20] sm:$0xff] 0.0
      %53 = vst [vmem:[#allocation2 + $0x28] sm:$0xff] 0.0
      %54 = vst [vmem:[#allocation2 + $0x30] sm:$0xff] 0.0
      %55 = vst [vmem:[#allocation2 + $0x38] sm:$0xff] 0.0
      %56 = vst [vmem:[#allocation2 + $0x40] sm:$0xff] 0.0
      %57 = vst [vmem:[#allocation2 + $0x48] sm:$0xff] 0.0
      %58 = vst [vmem:[#allocation2 + $0x50] sm:$0xff] 0.0
      %59 = vst [vmem:[#allocation2 + $0x58] sm:$0xff] 0.0
      %60 = vst [vmem:[#allocation2 + $0x60] sm:$0xff] 0.0
      %61 = vst [vmem:[#allocation2 + $0x68] sm:$0xff] 0.0
      %62 = vst [vmem:[#allocation2 + $0x70] sm:$0xff] 0.0
      %63 = vst [vmem:[#allocation2 + $0x78] sm:$0xff] 0.0
    $region25: #{tpu_custom_call.1} parent=1 // pred_fallthru
      _
    %v64 = vld [vmem:[#allocation2] sm:$0xff]
    %v65 = vld [vmem:[#allocation2 + $0x8] sm:$0xff]
    %v66 = vld [vmem:[#allocation2 + $0x10] sm:$0xff]
    %v67 = vld [vmem:[#allocation2 + $0x18] sm:$0xff]
    %v68 = vld [vmem:[#allocation2 + $0x20] sm:$0xff]
    %v69 = vld [vmem:[#allocation2 + $0x28] sm:$0xff]
    %v70 = vld [vmem:[#allocation2 + $0x30] sm:$0xff]
    %v71 = vld [vmem:[#allocation2 + $0x38] sm:$0xff]
    %v72 = vld [vmem:[#allocation2 + $0x40] sm:$0xff]
    %v73 = vld [vmem:[#allocation2 + $0x48] sm:$0xff]
    %v74 = vld [vmem:[#allocation2 + $0x50] sm:$0xff]
    %v75 = vld [vmem:[#allocation2 + $0x58] sm:$0xff]
    %v76 = vld [vmem:[#allocation2 + $0x60] sm:$0xff]
    %v77 = vld [vmem:[#allocation2 + $0x68] sm:$0xff]
    %v78 = vld [vmem:[#allocation2 + $0x70] sm:$0xff]
    %v79 = vld [vmem:[#allocation2 + $0x78] sm:$0xff]
    %v80 = vld [vmem:[#allocation3] sm:$0xff]
    %v81 = vld [vmem:[#allocation3 + $0x8] sm:$0xff]
    %v82 = vld [vmem:[#allocation3 + $0x10] sm:$0xff]
    %v83 = vld [vmem:[#allocation3 + $0x18] sm:$0xff]
    %v84 = vld [vmem:[#allocation3 + $0x20] sm:$0xff]
    %v85 = vld [vmem:[#allocation3 + $0x28] sm:$0xff]
    %v86 = vld [vmem:[#allocation3 + $0x30] sm:$0xff]
    %v87 = vld [vmem:[#allocation3 + $0x38] sm:$0xff]
    %v88 = vld [vmem:[#allocation3 + $0x40] sm:$0xff]
    %v89 = vld [vmem:[#allocation3 + $0x48] sm:$0xff]
    %v90 = vld [vmem:[#allocation3 + $0x50] sm:$0xff]
    %v91 = vld [vmem:[#allocation3 + $0x58] sm:$0xff]
    %v92 = vld [vmem:[#allocation3 + $0x60] sm:$0xff]
    %v93 = vld [vmem:[#allocation3 + $0x68] sm:$0xff]
    %v94 = vld [vmem:[#allocation3 + $0x70] sm:$0xff]
    %v95 = vld [vmem:[#allocation3 + $0x78] sm:$0xff]
    %v96 = vld [vmem:[#allocation6] sm:$0xf]
    %v97 = vld [vmem:[#allocation6 + $0x4] sm:$0xf]
    %v98 = vld [vmem:[#allocation6 + $0x8] sm:$0xf]
    %v99 = vld [vmem:[#allocation6 + $0xc] sm:$0xf]
    %v100 = vld [vmem:[#allocation6 + $0x10] sm:$0xf]
    %v101 = vld [vmem:[#allocation6 + $0x14] sm:$0xf]
    %v102 = vld [vmem:[#allocation6 + $0x18] sm:$0xf]
    %v103 = vld [vmem:[#allocation6 + $0x1c] sm:$0xf]
    %v104 = vld [vmem:[#allocation6 + $0x20] sm:$0xf]
    %v105 = vld [vmem:[#allocation6 + $0x24] sm:$0xf]
    %v106 = vld [vmem:[#allocation6 + $0x28] sm:$0xf]
    %v107 = vld [vmem:[#allocation6 + $0x2c] sm:$0xf]
    %v108 = vld [vmem:[#allocation6 + $0x30] sm:$0xf]
    %v109 = vld [vmem:[#allocation6 + $0x34] sm:$0xf]
    %v110 = vld [vmem:[#allocation6 + $0x38] sm:$0xf]
    %v111 = vld [vmem:[#allocation6 + $0x3c] sm:$0xf]
    %v112 = vld [vmem:[#allocation6 + $0x40] sm:$0xf]
    %v113 = vld [vmem:[#allocation6 + $0x44] sm:$0xf]
    %v114 = vld [vmem:[#allocation6 + $0x48] sm:$0xf]
    %v115 = vld [vmem:[#allocation6 + $0x4c] sm:$0xf]
    %v116 = vld [vmem:[#allocation6 + $0x50] sm:$0xf]
    %v117 = vld [vmem:[#allocation6 + $0x54] sm:$0xf]
    %v118 = vld [vmem:[#allocation6 + $0x58] sm:$0xf]
    %v119 = vld [vmem:[#allocation6 + $0x5c] sm:$0xf]
    %v120 = vld [vmem:[#allocation6 + $0x60] sm:$0xf]
    %v121 = vld [vmem:[#allocation6 + $0x64] sm:$0xf]
    %v122 = vld [vmem:[#allocation6 + $0x68] sm:$0xf]
    %v123 = vld [vmem:[#allocation6 + $0x6c] sm:$0xf]
    %v124 = vld [vmem:[#allocation6 + $0x70] sm:$0xf]
    %v125 = vld [vmem:[#allocation6 + $0x74] sm:$0xf]
    %v126 = vld [vmem:[#allocation6 + $0x78] sm:$0xf]
    %v127 = vld [vmem:[#allocation6 + $0x7c] sm:$0xf]
    %v144 = vunpack.c.l.b16 %v80
    %v145 = vunpack.c.h.b16 %v80
    %v146 = vunpack.c.l.b16 %v81
    %v147 = vunpack.c.h.b16 %v81
    %v148 = vunpack.c.l.b16 %v82
    %v149 = vunpack.c.h.b16 %v82
    %v150 = vunpack.c.l.b16 %v83
    %v151 = vunpack.c.h.b16 %v83
    %v152 = vunpack.c.l.b16 %v84
    %v153 = vunpack.c.h.b16 %v84
    %v154 = vunpack.c.l.b16 %v85
    %v155 = vunpack.c.h.b16 %v85
    %v156 = vunpack.c.l.b16 %v86
    %v157 = vunpack.c.h.b16 %v86
    %v158 = vunpack.c.l.b16 %v87
    %v159 = vunpack.c.h.b16 %v87
    %v160 = vunpack.c.l.b16 %v88
    %v161 = vunpack.c.h.b16 %v88
    %v162 = vunpack.c.l.b16 %v89
    %v163 = vunpack.c.h.b16 %v89
    %v164 = vunpack.c.l.b16 %v90
    %v165 = vunpack.c.h.b16 %v90
    %v166 = vunpack.c.l.b16 %v91
    %v167 = vunpack.c.h.b16 %v91
    %v168 = vunpack.c.l.b16 %v92
    %v169 = vunpack.c.h.b16 %v92
    %v170 = vunpack.c.l.b16 %v93
    %v171 = vunpack.c.h.b16 %v93
    %v172 = vunpack.c.l.b16 %v94
    %v173 = vunpack.c.h.b16 %v94
    %v174 = vunpack.c.l.b16 %v95
    %v175 = vunpack.c.h.b16 %v95
    %v176 = vpack.c.b16 %v146, %v144
    %v177 = vpack.c.b16 %v147, %v145
    %v178 = vpack.c.b16 %v150, %v148
    %v179 = vpack.c.b16 %v151, %v149
    %v180 = vpack.c.b16 %v154, %v152
    %v181 = vpack.c.b16 %v155, %v153
    %v182 = vpack.c.b16 %v158, %v156
    %v183 = vpack.c.b16 %v159, %v157
    %v184 = vpack.c.b16 %v162, %v160
    %v185 = vpack.c.b16 %v163, %v161
    %v186 = vpack.c.b16 %v166, %v164
    %v187 = vpack.c.b16 %v167, %v165
    %v188 = vpack.c.b16 %v170, %v168
    %v189 = vpack.c.b16 %v171, %v169
    %v190 = vpack.c.b16 %v174, %v172
    %v191 = vpack.c.b16 %v175, %v173
    %v240 = vunpack.c.l.b16 %v96
    %v241 = vunpack.c.l.b16 %v97
    %v242 = vunpack.c.l.b16 %v98
    %v243 = vunpack.c.l.b16 %v99
    %v244 = vunpack.c.l.b16 %v100
    %v245 = vunpack.c.l.b16 %v101
    %v246 = vunpack.c.l.b16 %v102
    %v247 = vunpack.c.l.b16 %v103
    %v248 = vunpack.c.l.b16 %v104
    %v249 = vunpack.c.l.b16 %v105
    %v250 = vunpack.c.l.b16 %v106
    %v251 = vunpack.c.l.b16 %v107
    %v252 = vunpack.c.l.b16 %v108
    %v253 = vunpack.c.l.b16 %v109
    %v254 = vunpack.c.l.b16 %v110
    %v255 = vunpack.c.l.b16 %v111
    %v256 = vunpack.c.l.b16 %v112
    %v257 = vunpack.c.l.b16 %v113
    %v258 = vunpack.c.l.b16 %v114
    %v259 = vunpack.c.l.b16 %v115
    %v260 = vunpack.c.l.b16 %v116
    %v261 = vunpack.c.l.b16 %v117
    %v262 = vunpack.c.l.b16 %v118
    %v263 = vunpack.c.l.b16 %v119
    %v264 = vunpack.c.l.b16 %v120
    %v265 = vunpack.c.l.b16 %v121
    %v266 = vunpack.c.l.b16 %v122
    %v267 = vunpack.c.l.b16 %v123
    %v268 = vunpack.c.l.b16 %v124
    %v269 = vunpack.c.l.b16 %v125
    %v270 = vunpack.c.l.b16 %v126
    %v271 = vunpack.c.l.b16 %v127
    %v272 = vpack.c.b16 %v241, %v240
    %v273 = vpack.c.b16 %v243, %v242
    %v274 = vpack.c.b16 %v245, %v244
    %v275 = vpack.c.b16 %v247, %v246
    %v276 = vpack.c.b16 %v249, %v248
    %v277 = vpack.c.b16 %v251, %v250
    %v278 = vpack.c.b16 %v253, %v252
    %v279 = vpack.c.b16 %v255, %v254
    %v280 = vpack.c.b16 %v257, %v256
    %v281 = vpack.c.b16 %v259, %v258
    %v282 = vpack.c.b16 %v261, %v260
    %v283 = vpack.c.b16 %v263, %v262
    %v284 = vpack.c.b16 %v265, %v264
    %v285 = vpack.c.b16 %v267, %v266
    %v286 = vpack.c.b16 %v269, %v268
    %v287 = vpack.c.b16 %v271, %v270
    %304 = vmatprep.subr.bf16.mxu0 0
    %305 = vmatpush1.bf16.msra.mxu0 %v272
    %306 = vmatprep.subr.bf16.mxu0 0
    %307 = vmatpush1.bf16.msra.mxu0 %v273
    %308 = vmatprep.subr.bf16.mxu0 0
    %309 = vmatpush1.bf16.msra.mxu0 %v274
    %310 = vmatprep.subr.bf16.mxu0 0
    %311 = vmatpush1.bf16.msra.mxu0 %v275
    %312 = vmatprep.subr.bf16.mxu0 0
    %313 = vmatpush1.bf16.msra.mxu0 %v276
    %314 = vmatprep.subr.bf16.mxu0 0
    %315 = vmatpush1.bf16.msra.mxu0 %v277
    %316 = vmatprep.subr.bf16.mxu0 0
    %317 = vmatpush1.bf16.msra.mxu0 %v278
    %318 = vmatprep.subr.bf16.mxu0 0
    %319 = vmatpush1.bf16.msra.mxu0 %v279
    %320 = vmatprep.subr.bf16.mxu0 0
    %321 = vmatpush1.bf16.msra.mxu0 %v280
    %322 = vmatprep.subr.bf16.mxu0 0
    %323 = vmatpush1.bf16.msra.mxu0 %v281
    %324 = vmatprep.subr.bf16.mxu0 0
    %325 = vmatpush1.bf16.msra.mxu0 %v282
    %326 = vmatprep.subr.bf16.mxu0 0
    %327 = vmatpush1.bf16.msra.mxu0 %v283
    %328 = vmatprep.subr.bf16.mxu0 0
    %329 = vmatpush1.bf16.msra.mxu0 %v284
    %330 = vmatprep.subr.bf16.mxu0 0
    %331 = vmatpush1.bf16.msra.mxu0 %v285
    %332 = vmatprep.subr.bf16.mxu0 0
    %333 = vmatpush1.bf16.msra.mxu0 %v286
    %334 = vmatprep.subr.bf16.mxu0 0
    %335 = vmatpush1.bf16.msra.mxu0 %v287
    %336 = vmatprep.mubr.bf16.mxu0 %v177
    %337 = vmatmul.mubr.bf16.gmra.mrb[0].mxu0 %v176
    %v338 = vpop.f32.mrb[0].mxu0
    %v339 = vadd.f32 0.0, %v338
    %v340 = vpop.f32.mrb[0].mxu0
    %v341 = vpop.f32.mrb[0].mxu0
    %v342 = vadd.f32 0.0, %v341
    %v343 = vpop.f32.mrb[0].mxu0
    %344 = vmatprep.mubr.bf16.mxu0 %v179
    %345 = vmatmul.mubr.bf16.gmra.mrb[0].mxu0 %v178
    %v346 = vpop.f32.mrb[0].mxu0
    %v347 = vadd.f32 0.0, %v346
    %v348 = vpop.f32.mrb[0].mxu0
    %v349 = vpop.f32.mrb[0].mxu0
    %v350 = vadd.f32 0.0, %v349
    %v351 = vpop.f32.mrb[0].mxu0
    %352 = vmatprep.mubr.bf16.mxu0 %v181
    %353 = vmatmul.mubr.bf16.gmra.mrb[0].mxu0 %v180
    %v354 = vpop.f32.mrb[0].mxu0
    %v355 = vadd.f32 0.0, %v354
    %v356 = vpop.f32.mrb[0].mxu0
    %v357 = vpop.f32.mrb[0].mxu0
    %v358 = vadd.f32 0.0, %v357
    %v359 = vpop.f32.mrb[0].mxu0
    %360 = vmatprep.mubr.bf16.mxu0 %v183
    %361 = vmatmul.mubr.bf16.gmra.mrb[0].mxu0 %v182
    %v362 = vpop.f32.mrb[0].mxu0
    %v363 = vadd.f32 0.0, %v362
    %v364 = vpop.f32.mrb[0].mxu0
    %v365 = vpop.f32.mrb[0].mxu0
    %v366 = vadd.f32 0.0, %v365
    %v367 = vpop.f32.mrb[0].mxu0
    %368 = vmatprep.mubr.bf16.mxu0 %v185
    %369 = vmatmul.mubr.bf16.gmra.mrb[0].mxu0 %v184
    %v370 = vpop.f32.mrb[0].mxu0
    %v371 = vadd.f32 0.0, %v370
    %v372 = vpop.f32.mrb[0].mxu0
    %v373 = vpop.f32.mrb[0].mxu0
    %v374 = vadd.f32 0.0, %v373
    %v375 = vpop.f32.mrb[0].mxu0
    %376 = vmatprep.mubr.bf16.mxu0 %v187
    %377 = vmatmul.mubr.bf16.gmra.mrb[0].mxu0 %v186
    %v378 = vpop.f32.mrb[0].mxu0
    %v379 = vadd.f32 0.0, %v378
    %v380 = vpop.f32.mrb[0].mxu0
    %v381 = vpop.f32.mrb[0].mxu0
    %v382 = vadd.f32 0.0, %v381
    %v383 = vpop.f32.mrb[0].mxu0
    %384 = vmatprep.mubr.bf16.mxu0 %v189
    %385 = vmatmul.mubr.bf16.gmra.mrb[0].mxu0 %v188
    %v386 = vpop.f32.mrb[0].mxu0
    %v387 = vadd.f32 0.0, %v386
    %v388 = vpop.f32.mrb[0].mxu0
    %v389 = vpop.f32.mrb[0].mxu0
    %v390 = vadd.f32 0.0, %v389
    %v391 = vpop.f32.mrb[0].mxu0
    %392 = vmatprep.mubr.bf16.mxu0 %v191
    %393 = vmatmul.mubr.bf16.gmra.mrb[0].mxu0 %v190
    %v394 = vpop.f32.mrb[0].mxu0
    %v395 = vadd.f32 0.0, %v394
    %v396 = vpop.f32.mrb[0].mxu0
    %v397 = vpop.f32.mrb[0].mxu0
    %v398 = vadd.f32 0.0, %v397
    %v399 = vpop.f32.mrb[0].mxu0
    %400 = vdwg.mxu0
    %v401 = vadd.f32 %v64, %v339
    %v402 = vadd.f32 %v65, %v342
    %v403 = vadd.f32 %v66, %v347
    %v404 = vadd.f32 %v67, %v350
    %v405 = vadd.f32 %v68, %v355
    %v406 = vadd.f32 %v69, %v358
    %v407 = vadd.f32 %v70, %v363
    %v408 = vadd.f32 %v71, %v366
    %v409 = vadd.f32 %v72, %v371
    %v410 = vadd.f32 %v73, %v374
    %v411 = vadd.f32 %v74, %v379
    %v412 = vadd.f32 %v75, %v382
    %v413 = vadd.f32 %v76, %v387
    %v414 = vadd.f32 %v77, %v390
    %v415 = vadd.f32 %v78, %v395
    %v416 = vadd.f32 %v79, %v398
    %417 = vst [vmem:[#allocation2] sm:$0xff] %v401
    %418 = vst [vmem:[#allocation2 + $0x8] sm:$0xff] %v402
    %419 = vst [vmem:[#allocation2 + $0x10] sm:$0xff] %v403
    %420 = vst [vmem:[#allocation2 + $0x18] sm:$0xff] %v404
    %421 = vst [vmem:[#allocation2 + $0x20] sm:$0xff] %v405
    %422 = vst [vmem:[#allocation2 + $0x28] sm:$0xff] %v406
    %423 = vst [vmem:[#allocation2 + $0x30] sm:$0xff] %v407
    %424 = vst [vmem:[#allocation2 + $0x38] sm:$0xff] %v408
    %425 = vst [vmem:[#allocation2 + $0x40] sm:$0xff] %v409
    %426 = vst [vmem:[#allocation2 + $0x48] sm:$0xff] %v410
    %427 = vst [vmem:[#allocation2 + $0x50] sm:$0xff] %v411
    %428 = vst [vmem:[#allocation2 + $0x58] sm:$0xff] %v412
    %429 = vst [vmem:[#allocation2 + $0x60] sm:$0xff] %v413
    %430 = vst [vmem:[#allocation2 + $0x68] sm:$0xff] %v414
    %431 = vst [vmem:[#allocation2 + $0x70] sm:$0xff] %v415
    %432 = vst [vmem:[#allocation2 + $0x78] sm:$0xff] %v416
    // Predicated region
    $region26: #{tpu_custom_call.1} parent=1 // pred_check
      %p433 = pneg %p44
    $region27: #{tpu_custom_call.1} parent=1 // pred_check_branch
      %435 = sbr.rel (%p433) target = $region29
    $region28: #{tpu_custom_call.1} parent=1 // pred_region
      %v436 = vld [vmem:[#allocation2] sm:$0xff]
      %v437 = vld [vmem:[#allocation2 + $0x8] sm:$0xff]
      %v438 = vld [vmem:[#allocation2 + $0x10] sm:$0xff]
      %v439 = vld [vmem:[#allocation2 + $0x18] sm:$0xff]
      %v440 = vld [vmem:[#allocation2 + $0x20] sm:$0xff]
      %v441 = vld [vmem:[#allocation2 + $0x28] sm:$0xff]
      %v442 = vld [vmem:[#allocation2 + $0x30] sm:$0xff]
      %v443 = vld [vmem:[#allocation2 + $0x38] sm:$0xff]
      %v444 = vld [vmem:[#allocation2 + $0x40] sm:$0xff]
      %v445 = vld [vmem:[#allocation2 + $0x48] sm:$0xff]
      %v446 = vld [vmem:[#allocation2 + $0x50] sm:$0xff]
      %v447 = vld [vmem:[#allocation2 + $0x58] sm:$0xff]
      %v448 = vld [vmem:[#allocation2 + $0x60] sm:$0xff]
      %v449 = vld [vmem:[#allocation2 + $0x68] sm:$0xff]
      %v450 = vld [vmem:[#allocation2 + $0x70] sm:$0xff]
      %v451 = vld [vmem:[#allocation2 + $0x78] sm:$0xff]
      %v452 = vld [vmem:[%s2] sm:$0x1]
      %v453 = vmul.f32 %v436, 0.999995
      %v454 = vmul.f32 %v437, 0.999995
      %v455 = vmul.f32 %v438, 0.999995
      %v456 = vmul.f32 %v439, 0.999995
      %v457 = vmul.f32 %v440, 0.999995
      %v458 = vmul.f32 %v441, 0.999995
      %v459 = vmul.f32 %v442, 0.999995
      %v460 = vmul.f32 %v443, 0.999995
      %v461 = vmul.f32 %v444, 0.999995
      %v462 = vmul.f32 %v445, 0.999995
      %v463 = vmul.f32 %v446, 0.999995
      %v464 = vmul.f32 %v447, 0.999995
      %v465 = vmul.f32 %v448, 0.999995
      %v466 = vmul.f32 %v449, 0.999995
      %v467 = vmul.f32 %v450, 0.999995
      %v468 = vmul.f32 %v451, 0.999995
      %v470 = vlaneseq
      %v471 = vshrl.u32 %v470, 7
      %v472 = vsub.s32 0, %v471
      %v473 = vrot.slane %v452, %v472
      %v475 = vadd.f32 %v453, %v473
      %v476 = vadd.f32 %v454, %v473
      %v477 = vadd.f32 %v455, %v473
      %v478 = vadd.f32 %v456, %v473
      %v479 = vadd.f32 %v457, %v473
      %v480 = vadd.f32 %v458, %v473
      %v481 = vadd.f32 %v459, %v473
      %v482 = vadd.f32 %v460, %v473
      %v483 = vadd.f32 %v461, %v473
      %v484 = vadd.f32 %v462, %v473
      %v485 = vadd.f32 %v463, %v473
      %v486 = vadd.f32 %v464, %v473
      %v487 = vadd.f32 %v465, %v473
      %v488 = vadd.f32 %v466, %v473
      %v489 = vadd.f32 %v467, %v473
      %v490 = vadd.f32 %v468, %v473
      %v491 = vmax.f32 %v475, 0.0
      %v492 = vmax.f32 %v476, 0.0
      %v493 = vmax.f32 %v477, 0.0
      %v494 = vmax.f32 %v478, 0.0
      %v495 = vmax.f32 %v479, 0.0
      %v496 = vmax.f32 %v480, 0.0
      %v497 = vmax.f32 %v481, 0.0
      %v498 = vmax.f32 %v482, 0.0
      %v499 = vmax.f32 %v483, 0.0
      %v500 = vmax.f32 %v484, 0.0
      %v501 = vmax.f32 %v485, 0.0
      %v502 = vmax.f32 %v486, 0.0
      %v503 = vmax.f32 %v487, 0.0
      %v504 = vmax.f32 %v488, 0.0
      %v505 = vmax.f32 %v489, 0.0
      %v506 = vmax.f32 %v490, 0.0
      %v507 = vpack.c.bf16 %v492, %v491
      %v508 = vpack.c.bf16 %v494, %v493
      %v509 = vpack.c.bf16 %v496, %v495
      %v510 = vpack.c.bf16 %v498, %v497
      %v511 = vpack.c.bf16 %v500, %v499
      %v512 = vpack.c.bf16 %v502, %v501
      %v513 = vpack.c.bf16 %v504, %v503
      %v514 = vpack.c.bf16 %v506, %v505
      %v523 = vunpack.c.l.b16 %v507
      %v524 = vunpack.c.h.b16 %v507
      %v525 = vunpack.c.l.b16 %v508
      %v526 = vunpack.c.h.b16 %v508
      %v527 = vunpack.c.l.b16 %v509
      %v528 = vunpack.c.h.b16 %v509
      %v529 = vunpack.c.l.b16 %v510
      %v530 = vunpack.c.h.b16 %v510
      %v531 = vunpack.c.l.b16 %v511
      %v532 = vunpack.c.h.b16 %v511
      %v533 = vunpack.c.l.b16 %v512
      %v534 = vunpack.c.h.b16 %v512
      %v535 = vunpack.c.l.b16 %v513
      %v536 = vunpack.c.h.b16 %v513
      %v537 = vunpack.c.l.b16 %v514
      %v538 = vunpack.c.h.b16 %v514
      %v539 = vpack.c.b16 %v523, %v523
      %v540 = vpack.c.b16 %v524, %v524
      %v541 = vpack.c.b16 %v525, %v525
      %v542 = vpack.c.b16 %v526, %v526
      %v543 = vpack.c.b16 %v527, %v527
      %v544 = vpack.c.b16 %v528, %v528
      %v545 = vpack.c.b16 %v529, %v529
      %v546 = vpack.c.b16 %v530, %v530
      %v547 = vpack.c.b16 %v531, %v531
      %v548 = vpack.c.b16 %v532, %v532
      %v549 = vpack.c.b16 %v533, %v533
      %v550 = vpack.c.b16 %v534, %v534
      %v551 = vpack.c.b16 %v535, %v535
      %v552 = vpack.c.b16 %v536, %v536
      %v553 = vpack.c.b16 %v537, %v537
      %v554 = vpack.c.b16 %v538, %v538
      %571 = vst [vmem:[#allocation8] sm:$0xf] %v539
      %572 = vst [vmem:[#allocation8 + $0x4] sm:$0xf] %v540
      %573 = vst [vmem:[#allocation8 + $0x8] sm:$0xf] %v541
      %574 = vst [vmem:[#allocation8 + $0xc] sm:$0xf] %v542
      %575 = vst [vmem:[#allocation8 + $0x10] sm:$0xf] %v543
      %576 = vst [vmem:[#allocation8 + $0x14] sm:$0xf] %v544
      %577 = vst [vmem:[#allocation8 + $0x18] sm:$0xf] %v545
      %578 = vst [vmem:[#allocation8 + $0x1c] sm:$0xf] %v546
      %579 = vst [vmem:[#allocation8 + $0x20] sm:$0xf] %v547
      %580 = vst [vmem:[#allocation8 + $0x24] sm:$0xf] %v548
      %581 = vst [vmem:[#allocation8 + $0x28] sm:$0xf] %v549
      %582 = vst [vmem:[#allocation8 + $0x2c] sm:$0xf] %v550
      %583 = vst [vmem:[#allocation8 + $0x30] sm:$0xf] %v551
      %584 = vst [vmem:[#allocation8 + $0x34] sm:$0xf] %v552
      %585 = vst [vmem:[#allocation8 + $0x38] sm:$0xf] %v553
      %586 = vst [vmem:[#allocation8 + $0x3c] sm:$0xf] %v554
    $region29: #{tpu_custom_call.1} parent=1 // pred_fallthru
      _
    // Predicated region
    $region30: #{tpu_custom_call.1} parent=1 // pred_check
      _
    $region31: #{tpu_custom_call.1} parent=1 // pred_check_branch
      %588 = sbr.rel (0) target = $region33
    $region32: #{tpu_custom_call.1} parent=1 // pred_region
      %s590 = ssub.s32 1024, 1024
      %591 = vsyncadd [#allocation5], %s590
      %s592 = sshll.u32 [#allocation8], 4
      %s593 = int_to_ptr.vmem [resolvable:$true] %s592
      %598 = dma.vmem_to_hbm [thread:$0]  %s593, 1024, %s3, [#allocation5], 64, 64, 4
    $region33: #{tpu_custom_call.1} parent=1 // pred_fallthru
      _
    // Predicated region
    $region34: #{tpu_custom_call.1} parent=1 // pred_check
      _
    $region35: #{tpu_custom_call.1} parent=1 // pred_check_branch
      %600 = sbr.rel (0) target = $region37
    $region36: #{tpu_custom_call.1} parent=1 // pred_region
      %601 = dma.done [#allocation5], 1024
    $region37: #{tpu_custom_call.1} parent=1 // pred_fallthru
      _
    %602 = vsyncpa [#allocation4], 1
    %603 = vsyncpa [#allocation7], 1
    %604 = vsyncpa [#allocation5], 1

</llo_original>
